<compile_context>
chip_gen: v7x
topology: tpu7x:2x2x1
jax: 0.10.0
libtpu: 0.0.40
codegen_flags: <defaults>
</compile_context>

<pallas_src>
import functools

import jax
import jax.numpy as jnp
from jax.experimental import pallas as pl
from jax.experimental.pallas import tpu as pltpu


_SEQ_TILE_BYTES = 8 * 1024 * 1024      # target ~8 MiB seq tiles per grid step
_D_CAP = 2048                          # max lanes per seq tile before splitting D
_VMEM_LIMIT_BYTES = 32 * 1024 * 1024   # 2 x 8 MiB seq buffers + mask + acc + slack


def _sublane_multiple(dtype):
    """Native sublane packing for the dtype (f32: 8, bf16: 16, int8/fp8: 32)."""
    return {4: 8, 2: 16, 1: 32}.get(jnp.dtype(dtype).itemsize, 8)


def _tiling(B, N, D, dtype):
    """Pick (b_tile, d_tile, n_tile, grid) for a (B, N, D) readout."""
    itemsize = jnp.dtype(dtype).itemsize

    # Batch tile: output dtype's sublane packing, or all of B when B is small.
    sub = _sublane_multiple(dtype)
    b_tile = sub if B >= sub else B
    nb = pl.cdiv(B, b_tile)

    # Hidden tile: full D unless it is huge, or we need a second parallel block
    # so both v7x TensorCores get work.
    if D > _D_CAP or (nb < 2 and D >= 256):
        d_cap = min(D, _D_CAP)
        if nb < 2:
            d_cap = min(d_cap, 128 * max(1, (D // 128) // 2))  # force >= 2 D blocks
        d_tile = 128 * max(1, d_cap // 128)
    else:
        d_tile = D
    nd = pl.cdiv(D, d_tile)

    # Node (reduction) tile: multiple of 128 (lane dim of the mask block and
    # sublane dim of the seq block) or full N, sized for ~_SEQ_TILE_BYTES.
    n_cap = max(1, _SEQ_TILE_BYTES // max(1, b_tile * d_tile * itemsize))
    if N <= n_cap or N < 128:
        n_tile = N
    else:
        n_tile = max(128, 128 * (n_cap // 128))
    nk = pl.cdiv(N, n_tile)

    return b_tile, d_tile, n_tile, (nb, nd, nk)


def _row_valid(shape, node_dim, k, n, n_tile):
    """Boolean mask of node rows still in-bounds for reduction step k."""
    rem = n - k * n_tile  # rows remaining (>= n_tile on non-tail steps)
    ids = jax.lax.broadcasted_iota(jnp.int32, shape, node_dim)
    return ids < rem


def _contract(msk_f32, seq_f32):
    """(bt, 1, nt) x (bt, nt, dt) -> (bt, 1, dt) on the MXU, f32 accumulate."""
    return jax.lax.dot_general(
        msk_f32, seq_f32,
        dimension_numbers=(((2,), (1,)), ((0,), (0,))),
        precision=jax.lax.Precision.HIGHEST,
        preferred_element_type=jnp.float32)


def _masked_kernel(denom_ref, seq_ref, msk_ref, out_ref, *acc, n, n_tile):
    # denom_ref: (1,1) f32 SMEM (global mask sum)
    # seq_ref: (bt, nt, dt)   msk_ref: (bt, 1, nt)   out_ref: (bt, 1, dt)
    acc_ref = acc[0] if acc else out_ref   # f32 outputs accumulate in place
    k = pl.program_id(2)

    @pl.when(k == 0)
    def _init():
        acc_ref[...] = jnp.zeros_like(acc_ref)

    seq = seq_ref[...].astype(jnp.float32)
    msk = msk_ref[...].astype(jnp.float32)
    if n % n_tile != 0:  # compile-time: a tail step exists
        # Out-of-bounds rows hold garbage (possibly Inf/NaN): select-zero both
        # operands so the contraction can never see 0 * Inf.
        seq = jnp.where(_row_valid(seq.shape, 1, k, n, n_tile), seq, 0.0)
        msk = jnp.where(_row_valid(msk.shape, 2, k, n, n_tile), msk, 0.0)

    acc_ref[...] += _contract(msk, seq)

    @pl.when(k == pl.num_programs(2) - 1)
    def _finalize():
        inv = 1.0 / denom_ref[0, 0]   # one scalar reciprocal per output block
        out_ref[...] = (acc_ref[...] * inv).astype(out_ref.dtype)


def _mean_kernel(seq_ref, out_ref, *acc, n, n_tile):
    acc_ref = acc[0] if acc else out_ref
    k = pl.program_id(2)

    @pl.when(k == 0)
    def _init():
        acc_ref[...] = jnp.zeros_like(acc_ref)

    seq = seq_ref[...].astype(jnp.float32)
    if n % n_tile != 0:
        seq = jnp.where(_row_valid(seq.shape, 1, k, n, n_tile), seq, 0.0)

    bt, nt = seq.shape[0], seq.shape[1]
    ones = jnp.ones((bt, 1, nt), jnp.float32)
    acc_ref[...] += _contract(ones, seq)

    @pl.when(k == pl.num_programs(2) - 1)
    def _finalize():
        out_ref[...] = (acc_ref[...] * (1.0 / n)).astype(out_ref.dtype)


def avg_readout(seq, msk=None):
    """Pallas equivalent of AvgReadout.forward(seq, msk).  seq: (B, N, D)."""
    B, N, D = seq.shape
    b_tile, d_tile, n_tile, grid = _tiling(B, N, D, seq.dtype)
    itemsize = jnp.dtype(seq.dtype).itemsize

    # f32 outputs accumulate directly in the resident output block; other
    # dtypes get an f32 VMEM accumulator and a cast at the last step.
    needs_scratch = jnp.dtype(seq.dtype) != jnp.float32
    scratch_shapes = ([pltpu.VMEM((b_tile, 1, d_tile), jnp.float32)]
                      if needs_scratch else [])

    # Output kept 3-D (B, 1, D) inside the kernel so the MXU result lands
    # directly in the output layout; reshaped to (B, D) outside (free).
    out_shape = jax.ShapeDtypeStruct((B, 1, D), seq.dtype)
    seq_spec = pl.BlockSpec((b_tile, n_tile, d_tile), lambda b, d, k: (b, k, d))
    out_spec = pl.BlockSpec((b_tile, 1, d_tile), lambda b, d, k: (b, 0, d))
    compiler_params = pltpu.CompilerParams(
        dimension_semantics=("parallel", "parallel", "arbitrary"),
        vmem_limit_bytes=_VMEM_LIMIT_BYTES)

    if msk is None:
        kernel = functools.partial(_mean_kernel, n=N, n_tile=n_tile)
        cost = pl.CostEstimate(
            flops=2 * B * N * D, transcendentals=0,
            bytes_accessed=B * N * D * itemsize + B * D * itemsize)
        out = pl.pallas_call(
            kernel,
            out_shape=out_shape,
            grid_spec=pltpu.PrefetchScalarGridSpec(
                num_scalar_prefetch=0,
                grid=grid,
                in_specs=[seq_spec],
                out_specs=out_spec,
                scratch_shapes=scratch_shapes),
            compiler_params=compiler_params,
            cost_estimate=cost,
        )(seq)
        return out.reshape(B, D)

    # glue: torch.unsqueeze(msk, -1) is folded into the contraction; the mask
    # rides as a lane-dense (B, 1, N) f32 array (exact for non-binary weights).
    msk3 = msk.astype(jnp.float32).reshape(B, 1, N)
    # GLOBAL denominator (sum over the whole mask, exactly as PyTorch), computed
    # once by a fused XLA reduce and passed as a (1, 1) SMEM scalar.
    denom = jnp.sum(msk3, dtype=jnp.float32).reshape(1, 1)

    kernel = functools.partial(_masked_kernel, n=N, n_tile=n_tile)
    cost = pl.CostEstimate(
        flops=2 * B * N * D, transcendentals=0,
        bytes_accessed=B * N * D * itemsize + B * N * 4 + B * D * itemsize)
    out = pl.pallas_call(
        kernel,
        out_shape=out_shape,
        grid_spec=pltpu.PrefetchScalarGridSpec(
            num_scalar_prefetch=0,
            grid=grid,
            in_specs=[
                pl.BlockSpec(memory_space=pltpu.MemorySpace.SMEM),  # denom scalar
                seq_spec,
                pl.BlockSpec((b_tile, 1, n_tile), lambda b, d, k: (b, 0, k)),
            ],
            out_specs=out_spec,
            scratch_shapes=scratch_shapes),
        compiler_params=compiler_params,
        cost_estimate=cost,
    )(denom, seq, msk3)
    return out.reshape(B, D)


if __name__ == "__main__":
    key = jax.random.PRNGKey(0)
    k1, k2 = jax.random.split(key)

    B, N, D = 2, 8, 32
    seq = jax.random.normal(k1, (B, N, D), dtype=jnp.float32)
    msk = (jax.random.uniform(k2, (B, N)) > 0.3).astype(jnp.float32)

    out_masked = jax.block_until_ready(avg_readout(seq, msk))
    out_mean = jax.block_until_ready(avg_readout(seq, None))

    # reference (plain JAX, mirrors the PyTorch forward)
    ref_masked = jnp.sum(seq * msk[..., None], axis=1) / jnp.sum(msk)
    ref_mean = jnp.mean(seq, axis=1)

    assert out_masked.shape == (B, D) and out_mean.shape == (B, D)
    assert jnp.allclose(out_masked, ref_masked, atol=1e-5, rtol=1e-5)
    assert jnp.allclose(out_mean, ref_mean, atol=1e-5, rtol=1e-5)

    print("KERNEL_OK")
</pallas_src>

<mosaic_0001>
module attributes {stable_mosaic.version = 11 : i64} {
  func.func @_masked_kernel(%arg0: i32, %arg1: i32, %arg2: i32, %arg3: memref<1x1xf32, #tpu.memory_space<smem>>, %arg4: memref<2x8x32xf32, #tpu.memory_space<vmem>>, %arg5: memref<2x1x8xf32, #tpu.memory_space<vmem>>, %arg6: memref<2x1x32xf32, #tpu.memory_space<vmem>>) attributes {dimension_semantics = [#tpu.dimension_semantics<parallel>, #tpu.dimension_semantics<parallel>, #tpu.dimension_semantics<arbitrary>], iteration_bounds = array<i64: 1, 1, 1>, scalar_prefetch = 0 : i64, scratch_operands = 0 : i64, tpu.core_type = #tpu.core_type<tc>, window_params = [{transform_indices = @transform_0, window_bounds = array<i64: 1, 1>}, {transform_indices = @transform_1, window_bounds = array<i64: 2, 8, 32>}, {transform_indices = @transform_2, window_bounds = array<i64: 2, 1, 8>}, {transform_indices = @transform_3, window_bounds = array<i64: 2, 1, 32>}]} {
    %c0_i32 = arith.constant 0 : i32
    %0 = arith.cmpi eq, %arg2, %c0_i32 : i32
    %1 = arith.extui %0 : i1 to i32
    %c0_i32_0 = arith.constant 0 : i32
    %2 = arith.cmpi ne, %1, %c0_i32_0 : i32
    scf.if %2 {
      %cst_14 = arith.constant 0.000000e+00 : f32
      %12 = vector.broadcast %cst_14 : f32 to vector<2x1x32xf32>
      %c0_15 = arith.constant 0 : index
      %c0_16 = arith.constant 0 : index
      %c0_17 = arith.constant 0 : index
      %13 = vector.load %arg6[%c0_15, %c0_16, %c0_17] : memref<2x1x32xf32, #tpu.memory_space<vmem>>, vector<2x1x32xf32>
      tpu.vector_store %arg6[%c0_15, %c0_16, %c0_17], %12 {strides = array<i32>} : memref<2x1x32xf32, #tpu.memory_space<vmem>>, vector<2x1x32xf32>,
    } else {
    }
    %c0 = arith.constant 0 : index
    %c0_1 = arith.constant 0 : index
    %c0_2 = arith.constant 0 : index
    %3 = vector.load %arg4[%c0, %c0_1, %c0_2] : memref<2x8x32xf32, #tpu.memory_space<vmem>>, vector<2x8x32xf32>
    %c0_3 = arith.constant 0 : index
    %c0_4 = arith.constant 0 : index
    %c0_5 = arith.constant 0 : index
    %4 = vector.load %arg5[%c0_3, %c0_4, %c0_5] : memref<2x1x8xf32, #tpu.memory_space<vmem>>, vector<2x1x8xf32>
    %c0_6 = arith.constant 0 : index
    %c0_7 = arith.constant 0 : index
    %c0_8 = arith.constant 0 : index
    %5 = vector.load %arg6[%c0_6, %c0_7, %c0_8] : memref<2x1x32xf32, #tpu.memory_space<vmem>>, vector<2x1x32xf32>
    %cst = arith.constant dense<0.000000e+00> : vector<2x1x32xf32>
    %6 = tpu.matmul %4, %3, %cst {dimension_numbers = #tpu.dot_dimension_numbers<[2], [1], [1], [2], [0, 0, 0, 1, 1, 2], [0], [0]>, precision = #tpu.contract_precision<fp32>} : vector<2x1x8xf32>, vector<2x8x32xf32>, vector<2x1x32xf32> -> vector<2x1x32xf32>
    %7 = arith.addf %5, %6 : vector<2x1x32xf32>
    %c0_9 = arith.constant 0 : index
    %c0_10 = arith.constant 0 : index
    %c0_11 = arith.constant 0 : index
    %8 = vector.load %arg6[%c0_9, %c0_10, %c0_11] : memref<2x1x32xf32, #tpu.memory_space<vmem>>, vector<2x1x32xf32>
    tpu.vector_store %arg6[%c0_9, %c0_10, %c0_11], %7 {strides = array<i32>} : memref<2x1x32xf32, #tpu.memory_space<vmem>>, vector<2x1x32xf32>,
    %c0_i32_12 = arith.constant 0 : i32
    %9 = arith.cmpi eq, %arg2, %c0_i32_12 : i32
    %10 = arith.extui %9 : i1 to i32
    %c0_i32_13 = arith.constant 0 : i32
    %11 = arith.cmpi ne, %10, %c0_i32_13 : i32
    scf.if %11 {
      %c0_14 = arith.constant 0 : index
      %c0_15 = arith.constant 0 : index
      %12 = memref.load %arg3[%c0_14, %c0_15] : memref<1x1xf32, #tpu.memory_space<smem>>
      %cst_16 = arith.constant 1.000000e+00 : f32
      %13 = arith.divf %cst_16, %12 : f32
      %c0_17 = arith.constant 0 : index
      %c0_18 = arith.constant 0 : index
      %c0_19 = arith.constant 0 : index
      %14 = vector.load %arg6[%c0_17, %c0_18, %c0_19] : memref<2x1x32xf32, #tpu.memory_space<vmem>>, vector<2x1x32xf32>
      %15 = vector.broadcast %13 : f32 to vector<2x1x32xf32>
      %16 = arith.mulf %14, %15 : vector<2x1x32xf32>
      %c0_20 = arith.constant 0 : index
      %c0_21 = arith.constant 0 : index
      %c0_22 = arith.constant 0 : index
      %17 = vector.load %arg6[%c0_20, %c0_21, %c0_22] : memref<2x1x32xf32, #tpu.memory_space<vmem>>, vector<2x1x32xf32>
      tpu.vector_store %arg6[%c0_20, %c0_21, %c0_22], %16 {strides = array<i32>} : memref<2x1x32xf32, #tpu.memory_space<vmem>>, vector<2x1x32xf32>,
    } else {
    }
    return
  }
  func.func @transform_0(%arg0: i32, %arg1: i32, %arg2: i32) -> (i32, i32) {
    %c0_i32 = arith.constant 0 : i32
    %c0_i32_0 = arith.constant 0 : i32
    %c0_i32_1 = arith.constant 0 : i32
    return %c0_i32, %c0_i32_0 : i32, i32
  }
  func.func @transform_1(%arg0: i32, %arg1: i32, %arg2: i32) -> (i32, i32, i32) {
    %c0_i32 = arith.constant 0 : i32
    return %arg0, %arg2, %arg1 : i32, i32, i32
  }
  func.func @transform_2(%arg0: i32, %arg1: i32, %arg2: i32) -> (i32, i32, i32) {
    %c0_i32 = arith.constant 0 : i32
    %c0_i32_0 = arith.constant 0 : i32
    return %arg0, %c0_i32, %arg2 : i32, i32, i32
  }
  func.func @transform_3(%arg0: i32, %arg1: i32, %arg2: i32) -> (i32, i32, i32) {
    %c0_i32 = arith.constant 0 : i32
    %c0_i32_0 = arith.constant 0 : i32
    return %arg0, %c0_i32, %arg1 : i32, i32, i32
  }
}

</mosaic_0001>

<llo_original>
// kernel: tpu_custom_call.1
$region0: #{tpu_custom_call.1}
  #allocation0 [shape = 'u32[]', space=smem, size = 0x4, offset = 0x4, fixed_abs, tag = 'smem constant byte address 0x4 - core index']
  #allocation1 [shape = 'u32[144,128]{1,0:T(1,128)}', space=vmem, size = 0x12000, scoped, tag = 'internal scratch']
  #allocation2 [shape = 'f32[1,1]{1,0:T(1,128)S(6)}', space=smem, size = 0x200, scoped, tag = 'scoped memory for tpu_custom_call.1']
  %s0 = inlined_call_operand.<no memory space> [shape: f32[1,1], index: 0, kind: input, shape index: {}]
  %s1 = inlined_call_operand.hbm [shape: f32[2,8,32], index: 1, kind: input, shape index: {}]
  %s2 = inlined_call_operand.vmem [shape: f32[2,1,8], index: 2, kind: input, shape index: {}]
  %s3 = inlined_call_operand.hbm [shape: f32[2,1,32], index: 3, kind: output, shape index: {}]
  %s4 = sld [smem:[#allocation0]]
  $region34: #{tpu_custom_call.1} parent=0
    _
  %s6 = ssub.s32 1, %s4
  %s7 = scalar_select 0, %s6, %s4
  %8 = sst [smem:[#allocation2]] %s0
  $region1: #{tpu_custom_call.1} parent=0
    #allocation3 [shape = 'u8[8192]{0}', space=vmem, size = 0x2000, scoped, tag = 'input window, operand 1, single buffered']
    #allocation4 [shape = 's32[1]{0}', space=sflag, size = 0x4, scoped, tag = 'scoped memory for tpu_custom_call.1']
    #allocation5 [shape = 's32[1]{0}', space=sflag, size = 0x4, scoped, tag = 'scoped memory for tpu_custom_call.1']
    #allocation6 [shape = 'u8[1024]{0}', space=vmem, size = 0x400, scoped, tag = 'output window, operand 0, single buffered']
    %9 = vsyncpa [#allocation4], 0
    %10 = vsyncpa [#allocation5], 0
    // Predicated region
    $region2: #{tpu_custom_call.1} parent=1 // pred_check
      _
    $region3: #{tpu_custom_call.1} parent=1 // pred_check_branch
      %12 = sbr.rel (0) target = $region5
    $region4: #{tpu_custom_call.1} parent=1 // pred_region
      _
    $region5: #{tpu_custom_call.1} parent=1 // pred_fallthru
      _
    // Predicated region
    $region6: #{tpu_custom_call.1} parent=1 // pred_check
      _
    $region7: #{tpu_custom_call.1} parent=1 // pred_check_branch
      %14 = sbr.rel (0) target = $region9
    $region8: #{tpu_custom_call.1} parent=1 // pred_region
      %s16 = ssub.s32 256, 256
      %17 = vsyncadd [#allocation4], %s16
      %s18 = sshll.u32 [#allocation3], 4
      %s19 = int_to_ptr.vmem [resolvable:$true] %s18
      %24 = dma.hbm_to_vmem [thread:$0]  %s1, 256, %s19, [#allocation4], 128, 128, 8
    $region9: #{tpu_custom_call.1} parent=1 // pred_fallthru
      _
    // Predicated region
    $region10: #{tpu_custom_call.1} parent=1 // pred_check
      _
    $region11: #{tpu_custom_call.1} parent=1 // pred_check_branch
      %26 = sbr.rel (0) target = $region13
    $region12: #{tpu_custom_call.1} parent=1 // pred_region
      _
    $region13: #{tpu_custom_call.1} parent=1 // pred_fallthru
      _
    // Predicated region
    $region14: #{tpu_custom_call.1} parent=1 // pred_check
      _
    $region15: #{tpu_custom_call.1} parent=1 // pred_check_branch
      %28 = sbr.rel (0) target = $region17
    $region16: #{tpu_custom_call.1} parent=1 // pred_region
      %29 = dma.done [#allocation4], 256
    $region17: #{tpu_custom_call.1} parent=1 // pred_fallthru
      _
    %p30 = scmp.eq.s32.totalorder 0, 0
    // Predicated region
    $region18: #{tpu_custom_call.1} parent=1 // pred_check
      %p31 = pneg %p30
    $region19: #{tpu_custom_call.1} parent=1 // pred_check_branch
      %33 = sbr.rel (%p31) target = $region21
    $region20: #{tpu_custom_call.1} parent=1 // pred_region
      %vm34 = vcmask 253952
      %35 = vst.msk [vmem:[#allocation6] sm:$0x1] %vm34, 0.0
      %36 = vst.msk [vmem:[#allocation6 + $0x1] sm:$0x1] %vm34, 0.0
    $region21: #{tpu_custom_call.1} parent=1 // pred_fallthru
      _
    %v37 = vld [vmem:[#allocation3] sm:$0xff]
    %v38 = vld [vmem:[#allocation3 + $0x8] sm:$0xff]
    %v39 = vld [vmem:[%s2] sm:$0x1]
    %v40 = vld [vmem:[%s2 + $0x1] sm:$0x1]
    %v41 = vld [vmem:[#allocation6] sm:$0x1]
    %v42 = vld [vmem:[#allocation6 + $0x1] sm:$0x1]
    %vm43 = vcmask 64512
    %v45 = vsel %vm43, %v39, 0
    %47 = vmatprep.subr.mxu0 0.0
    %v48 = vand.u32 %v37, 4294901760
    %49 = vmatpush1.msra.mxu0 %v48
    %50 = vmatprep.subr.mxu0 0.0
    %51 = vmatpush1.msra.mxu0 0.0
    %52 = vmatprep.subr.mxu0 0.0
    %53 = vmatpush1.msra.mxu0 0.0
    %54 = vmatprep.subr.mxu0 0.0
    %55 = vmatpush1.msra.mxu0 0.0
    %56 = vmatprep.subr.mxu0 0.0
    %57 = vmatpush1.msra.mxu0 0.0
    %58 = vmatprep.subr.mxu0 0.0
    %59 = vmatpush1.msra.mxu0 0.0
    %60 = vmatprep.subr.mxu0 0.0
    %61 = vmatpush1.msra.mxu0 0.0
    %62 = vmatprep.subr.mxu0 0.0
    %63 = vmatpush1.msra.mxu0 0.0
    %64 = vmatprep.subr.mxu0 0.0
    %65 = vmatpush1.msra.mxu0 0.0
    %66 = vmatprep.subr.mxu0 0.0
    %67 = vmatpush1.msra.mxu0 0.0
    %68 = vmatprep.subr.mxu0 0.0
    %69 = vmatpush1.msra.mxu0 0.0
    %70 = vmatprep.subr.mxu0 0.0
    %71 = vmatpush1.msra.mxu0 0.0
    %72 = vmatprep.subr.mxu0 0.0
    %73 = vmatpush1.msra.mxu0 0.0
    %74 = vmatprep.subr.mxu0 0.0
    %75 = vmatpush1.msra.mxu0 0.0
    %76 = vmatprep.subr.mxu0 0.0
    %77 = vmatpush1.msra.mxu0 0.0
    %78 = vmatprep.subr.mxu0 0.0
    %79 = vmatpush1.msra.mxu0 0.0
    %80 = vmatprep.subr.mxu0 0.0
    %81 = vmatpush1.msra.mxu0 0.0
    %82 = vmatprep.subr.mxu0 0.0
    %83 = vmatpush1.msra.mxu0 0.0
    %84 = vmatprep.subr.mxu0 0.0
    %85 = vmatpush1.msra.mxu0 0.0
    %86 = vmatprep.subr.mxu0 0.0
    %87 = vmatpush1.msra.mxu0 0.0
    %88 = vmatprep.subr.mxu0 0.0
    %89 = vmatpush1.msra.mxu0 0.0
    %90 = vmatprep.subr.mxu0 0.0
    %91 = vmatpush1.msra.mxu0 0.0
    %92 = vmatprep.subr.mxu0 0.0
    %93 = vmatpush1.msra.mxu0 0.0
    %94 = vmatprep.subr.mxu0 0.0
    %95 = vmatpush1.msra.mxu0 0.0
    %96 = vmatprep.subr.mxu0 0.0
    %97 = vmatpush1.msra.mxu0 0.0
    %98 = vmatprep.subr.mxu0 0.0
    %99 = vmatpush1.msra.mxu0 0.0
    %100 = vmatprep.subr.mxu0 0.0
    %101 = vmatpush1.msra.mxu0 0.0
    %102 = vmatprep.subr.mxu0 0.0
    %103 = vmatpush1.msra.mxu0 0.0
    %104 = vmatprep.subr.mxu0 0.0
    %105 = vmatpush1.msra.mxu0 0.0
    %106 = vmatprep.subr.mxu0 0.0
    %107 = vmatpush1.msra.mxu0 0.0
    %108 = vmatprep.subr.mxu0 0.0
    %109 = vmatpush1.msra.mxu0 0.0
    %110 = vmatprep.subr.mxu0 0.0
    %111 = vmatpush1.msra.mxu0 0.0
    %112 = vmatprep.mubr.f32.mxu0 0.0
    %v113 = vand.u32 %v45, 4294901760
    %v114 = vsub.f32 %v45, %v113
    %v115 = vand.u32 %v114, 4294901760
    %v116 = vsub.f32 %v114, %v115
    %v117 = vand.u32 %v116, 4294901760
    %118 = vmatmul.mubr.f32.gmra.mrb[0].mxu0 %v117
    %v119 = vpop.f32.mrb[0].mxu0
    %v120 = vadd.f32 0.0, %v119
    %v121 = vpop.f32.mrb[0].mxu0
    %122 = vdwg.mxu0
    %123 = vmatprep.subr.mxu0 0.0
    %v124 = vand.u32 %v37, 4294901760
    %v125 = vsub.f32 %v37, %v124
    %v126 = vand.u32 %v125, 4294901760
    %v127 = vsub.f32 %v125, %v126
    %v128 = vand.u32 %v127, 4294901760
    %129 = vmatpush1.msra.mxu0 %v128
    %130 = vmatprep.subr.mxu0 0.0
    %131 = vmatpush1.msra.mxu0 0.0
    %132 = vmatprep.subr.mxu0 0.0
    %133 = vmatpush1.msra.mxu0 0.0
    %134 = vmatprep.subr.mxu0 0.0
    %135 = vmatpush1.msra.mxu0 0.0
    %136 = vmatprep.subr.mxu0 0.0
    %137 = vmatpush1.msra.mxu0 0.0
    %138 = vmatprep.subr.mxu0 0.0
    %139 = vmatpush1.msra.mxu0 0.0
    %140 = vmatprep.subr.mxu0 0.0
    %141 = vmatpush1.msra.mxu0 0.0
    %142 = vmatprep.subr.mxu0 0.0
    %143 = vmatpush1.msra.mxu0 0.0
    %144 = vmatprep.subr.mxu0 0.0
    %145 = vmatpush1.msra.mxu0 0.0
    %146 = vmatprep.subr.mxu0 0.0
    %147 = vmatpush1.msra.mxu0 0.0
    %148 = vmatprep.subr.mxu0 0.0
    %149 = vmatpush1.msra.mxu0 0.0
    %150 = vmatprep.subr.mxu0 0.0
    %151 = vmatpush1.msra.mxu0 0.0
    %152 = vmatprep.subr.mxu0 0.0
    %153 = vmatpush1.msra.mxu0 0.0
    %154 = vmatprep.subr.mxu0 0.0
    %155 = vmatpush1.msra.mxu0 0.0
    %156 = vmatprep.subr.mxu0 0.0
    %157 = vmatpush1.msra.mxu0 0.0
    %158 = vmatprep.subr.mxu0 0.0
    %159 = vmatpush1.msra.mxu0 0.0
    %160 = vmatprep.subr.mxu0 0.0
    %161 = vmatpush1.msra.mxu0 0.0
    %162 = vmatprep.subr.mxu0 0.0
    %163 = vmatpush1.msra.mxu0 0.0
    %164 = vmatprep.subr.mxu0 0.0
    %165 = vmatpush1.msra.mxu0 0.0
    %166 = vmatprep.subr.mxu0 0.0
    %167 = vmatpush1.msra.mxu0 0.0
    %168 = vmatprep.subr.mxu0 0.0
    %169 = vmatpush1.msra.mxu0 0.0
    %170 = vmatprep.subr.mxu0 0.0
    %171 = vmatpush1.msra.mxu0 0.0
    %172 = vmatprep.subr.mxu0 0.0
    %173 = vmatpush1.msra.mxu0 0.0
    %174 = vmatprep.subr.mxu0 0.0
    %175 = vmatpush1.msra.mxu0 0.0
    %176 = vmatprep.subr.mxu0 0.0
    %177 = vmatpush1.msra.mxu0 0.0
    %178 = vmatprep.subr.mxu0 0.0
    %179 = vmatpush1.msra.mxu0 0.0
    %180 = vmatprep.subr.mxu0 0.0
    %181 = vmatpush1.msra.mxu0 0.0
    %182 = vmatprep.subr.mxu0 0.0
    %183 = vmatpush1.msra.mxu0 0.0
    %184 = vmatprep.subr.mxu0 0.0
    %185 = vmatpush1.msra.mxu0 0.0
    %186 = vmatprep.subr.mxu0 0.0
    %187 = vmatpush1.msra.mxu0 0.0
    %188 = vmatprep.subr.mxu0 0.0
    %189 = vmatpush1.msra.mxu0 0.0
    %190 = vmatprep.subr.mxu0 0.0
    %191 = vmatpush1.msra.mxu0 0.0
    %192 = vmatprep.mubr.f32.mxu0 0.0
    %v193 = vand.u32 %v45, 4294901760
    %194 = vmatmul.mubr.f32.gmra.mrb[0].mxu0 %v193
    %v195 = vpop.f32.mrb[0].mxu0
    %v196 = vadd.f32 %v120, %v195
    %v197 = vpop.f32.mrb[0].mxu0
    %198 = vdwg.mxu0
    %199 = vmatprep.subr.mxu0 0.0
    %v200 = vand.u32 %v37, 4294901760
    %v201 = vsub.f32 %v37, %v200
    %202 = vmatpush1.msra.mxu0 %v201
    %203 = vmatprep.subr.mxu0 0.0
    %204 = vmatpush1.msra.mxu0 0.0
    %205 = vmatprep.subr.mxu0 0.0
    %206 = vmatpush1.msra.mxu0 0.0
    %207 = vmatprep.subr.mxu0 0.0
    %208 = vmatpush1.msra.mxu0 0.0
    %209 = vmatprep.subr.mxu0 0.0
    %210 = vmatpush1.msra.mxu0 0.0
    %211 = vmatprep.subr.mxu0 0.0
    %212 = vmatpush1.msra.mxu0 0.0
    %213 = vmatprep.subr.mxu0 0.0
    %214 = vmatpush1.msra.mxu0 0.0
    %215 = vmatprep.subr.mxu0 0.0
    %216 = vmatpush1.msra.mxu0 0.0
    %217 = vmatprep.subr.mxu0 0.0
    %218 = vmatpush1.msra.mxu0 0.0
    %219 = vmatprep.subr.mxu0 0.0
    %220 = vmatpush1.msra.mxu0 0.0
    %221 = vmatprep.subr.mxu0 0.0
    %222 = vmatpush1.msra.mxu0 0.0
    %223 = vmatprep.subr.mxu0 0.0
    %224 = vmatpush1.msra.mxu0 0.0
    %225 = vmatprep.subr.mxu0 0.0
    %226 = vmatpush1.msra.mxu0 0.0
    %227 = vmatprep.subr.mxu0 0.0
    %228 = vmatpush1.msra.mxu0 0.0
    %229 = vmatprep.subr.mxu0 0.0
    %230 = vmatpush1.msra.mxu0 0.0
    %231 = vmatprep.subr.mxu0 0.0
    %232 = vmatpush1.msra.mxu0 0.0
    %233 = vmatprep.subr.mxu0 0.0
    %234 = vmatpush1.msra.mxu0 0.0
    %235 = vmatprep.subr.mxu0 0.0
    %236 = vmatpush1.msra.mxu0 0.0
    %237 = vmatprep.subr.mxu0 0.0
    %238 = vmatpush1.msra.mxu0 0.0
    %239 = vmatprep.subr.mxu0 0.0
    %240 = vmatpush1.msra.mxu0 0.0
    %241 = vmatprep.subr.mxu0 0.0
    %242 = vmatpush1.msra.mxu0 0.0
    %243 = vmatprep.subr.mxu0 0.0
    %244 = vmatpush1.msra.mxu0 0.0
    %245 = vmatprep.subr.mxu0 0.0
    %246 = vmatpush1.msra.mxu0 0.0
    %247 = vmatprep.subr.mxu0 0.0
    %248 = vmatpush1.msra.mxu0 0.0
    %249 = vmatprep.subr.mxu0 0.0
    %250 = vmatpush1.msra.mxu0 0.0
    %251 = vmatprep.subr.mxu0 0.0
    %252 = vmatpush1.msra.mxu0 0.0
    %253 = vmatprep.subr.mxu0 0.0
    %254 = vmatpush1.msra.mxu0 0.0
    %255 = vmatprep.subr.mxu0 0.0
    %256 = vmatpush1.msra.mxu0 0.0
    %257 = vmatprep.subr.mxu0 0.0
    %258 = vmatpush1.msra.mxu0 0.0
    %259 = vmatprep.subr.mxu0 0.0
    %260 = vmatpush1.msra.mxu0 0.0
    %261 = vmatprep.subr.mxu0 0.0
    %262 = vmatpush1.msra.mxu0 0.0
    %263 = vmatprep.subr.mxu0 0.0
    %264 = vmatpush1.msra.mxu0 0.0
    %265 = vmatprep.mubr.f32.mxu0 0.0
    %v266 = vand.u32 %v45, 4294901760
    %v267 = vsub.f32 %v45, %v266
    %268 = vmatmul.mubr.f32.gmra.mrb[0].mxu0 %v267
    %v269 = vpop.f32.mrb[0].mxu0
    %v270 = vadd.f32 %v196, %v269
    %v271 = vpop.f32.mrb[0].mxu0
    %272 = vdwg.mxu0
    %273 = vmatprep.subr.mxu0 0.0
    %v274 = vand.u32 %v37, 4294901760
    %275 = vmatpush1.msra.mxu0 %v274
    %276 = vmatprep.subr.mxu0 0.0
    %277 = vmatpush1.msra.mxu0 0.0
    %278 = vmatprep.subr.mxu0 0.0
    %279 = vmatpush1.msra.mxu0 0.0
    %280 = vmatprep.subr.mxu0 0.0
    %281 = vmatpush1.msra.mxu0 0.0
    %282 = vmatprep.subr.mxu0 0.0
    %283 = vmatpush1.msra.mxu0 0.0
    %284 = vmatprep.subr.mxu0 0.0
    %285 = vmatpush1.msra.mxu0 0.0
    %286 = vmatprep.subr.mxu0 0.0
    %287 = vmatpush1.msra.mxu0 0.0
    %288 = vmatprep.subr.mxu0 0.0
    %289 = vmatpush1.msra.mxu0 0.0
    %290 = vmatprep.subr.mxu0 0.0
    %291 = vmatpush1.msra.mxu0 0.0
    %292 = vmatprep.subr.mxu0 0.0
    %293 = vmatpush1.msra.mxu0 0.0
    %294 = vmatprep.subr.mxu0 0.0
    %295 = vmatpush1.msra.mxu0 0.0
    %296 = vmatprep.subr.mxu0 0.0
    %297 = vmatpush1.msra.mxu0 0.0
    %298 = vmatprep.subr.mxu0 0.0
    %299 = vmatpush1.msra.mxu0 0.0
    %300 = vmatprep.subr.mxu0 0.0
    %301 = vmatpush1.msra.mxu0 0.0
    %302 = vmatprep.subr.mxu0 0.0
    %303 = vmatpush1.msra.mxu0 0.0
    %304 = vmatprep.subr.mxu0 0.0
    %305 = vmatpush1.msra.mxu0 0.0
    %306 = vmatprep.subr.mxu0 0.0
    %307 = vmatpush1.msra.mxu0 0.0
    %308 = vmatprep.subr.mxu0 0.0
    %309 = vmatpush1.msra.mxu0 0.0
    %310 = vmatprep.subr.mxu0 0.0
    %311 = vmatpush1.msra.mxu0 0.0
    %312 = vmatprep.subr.mxu0 0.0
    %313 = vmatpush1.msra.mxu0 0.0
    %314 = vmatprep.subr.mxu0 0.0
    %315 = vmatpush1.msra.mxu0 0.0
    %316 = vmatprep.subr.mxu0 0.0
    %317 = vmatpush1.msra.mxu0 0.0
    %318 = vmatprep.subr.mxu0 0.0
    %319 = vmatpush1.msra.mxu0 0.0
    %320 = vmatprep.subr.mxu0 0.0
    %321 = vmatpush1.msra.mxu0 0.0
    %322 = vmatprep.subr.mxu0 0.0
    %323 = vmatpush1.msra.mxu0 0.0
    %324 = vmatprep.subr.mxu0 0.0
    %325 = vmatpush1.msra.mxu0 0.0
    %326 = vmatprep.subr.mxu0 0.0
    %327 = vmatpush1.msra.mxu0 0.0
    %328 = vmatprep.subr.mxu0 0.0
    %329 = vmatpush1.msra.mxu0 0.0
    %330 = vmatprep.subr.mxu0 0.0
    %331 = vmatpush1.msra.mxu0 0.0
    %332 = vmatprep.subr.mxu0 0.0
    %333 = vmatpush1.msra.mxu0 0.0
    %334 = vmatprep.subr.mxu0 0.0
    %335 = vmatpush1.msra.mxu0 0.0
    %336 = vmatprep.subr.mxu0 0.0
    %337 = vmatpush1.msra.mxu0 0.0
    %338 = vmatprep.mubr.f32.mxu0 0.0
    %v339 = vand.u32 %v45, 4294901760
    %v340 = vsub.f32 %v45, %v339
    %v341 = vand.u32 %v340, 4294901760
    %342 = vmatmul.mubr.f32.gmra.mrb[0].mxu0 %v341
    %v343 = vpop.f32.mrb[0].mxu0
    %v344 = vadd.f32 %v270, %v343
    %v345 = vpop.f32.mrb[0].mxu0
    %346 = vdwg.mxu0
    %347 = vmatprep.subr.mxu0 0.0
    %v348 = vand.u32 %v37, 4294901760
    %v349 = vsub.f32 %v37, %v348
    %v350 = vand.u32 %v349, 4294901760
    %351 = vmatpush1.msra.mxu0 %v350
    %352 = vmatprep.subr.mxu0 0.0
    %353 = vmatpush1.msra.mxu0 0.0
    %354 = vmatprep.subr.mxu0 0.0
    %355 = vmatpush1.msra.mxu0 0.0
    %356 = vmatprep.subr.mxu0 0.0
    %357 = vmatpush1.msra.mxu0 0.0
    %358 = vmatprep.subr.mxu0 0.0
    %359 = vmatpush1.msra.mxu0 0.0
    %360 = vmatprep.subr.mxu0 0.0
    %361 = vmatpush1.msra.mxu0 0.0
    %362 = vmatprep.subr.mxu0 0.0
    %363 = vmatpush1.msra.mxu0 0.0
    %364 = vmatprep.subr.mxu0 0.0
    %365 = vmatpush1.msra.mxu0 0.0
    %366 = vmatprep.subr.mxu0 0.0
    %367 = vmatpush1.msra.mxu0 0.0
    %368 = vmatprep.subr.mxu0 0.0
    %369 = vmatpush1.msra.mxu0 0.0
    %370 = vmatprep.subr.mxu0 0.0
    %371 = vmatpush1.msra.mxu0 0.0
    %372 = vmatprep.subr.mxu0 0.0
    %373 = vmatpush1.msra.mxu0 0.0
    %374 = vmatprep.subr.mxu0 0.0
    %375 = vmatpush1.msra.mxu0 0.0
    %376 = vmatprep.subr.mxu0 0.0
    %377 = vmatpush1.msra.mxu0 0.0
    %378 = vmatprep.subr.mxu0 0.0
    %379 = vmatpush1.msra.mxu0 0.0
    %380 = vmatprep.subr.mxu0 0.0
    %381 = vmatpush1.msra.mxu0 0.0
    %382 = vmatprep.subr.mxu0 0.0
    %383 = vmatpush1.msra.mxu0 0.0
    %384 = vmatprep.subr.mxu0 0.0
    %385 = vmatpush1.msra.mxu0 0.0
    %386 = vmatprep.subr.mxu0 0.0
    %387 = vmatpush1.msra.mxu0 0.0
    %388 = vmatprep.subr.mxu0 0.0
    %389 = vmatpush1.msra.mxu0 0.0
    %390 = vmatprep.subr.mxu0 0.0
    %391 = vmatpush1.msra.mxu0 0.0
    %392 = vmatprep.subr.mxu0 0.0
    %393 = vmatpush1.msra.mxu0 0.0
    %394 = vmatprep.subr.mxu0 0.0
    %395 = vmatpush1.msra.mxu0 0.0
    %396 = vmatprep.subr.mxu0 0.0
    %397 = vmatpush1.msra.mxu0 0.0
    %398 = vmatprep.subr.mxu0 0.0
    %399 = vmatpush1.msra.mxu0 0.0
    %400 = vmatprep.subr.mxu0 0.0
    %401 = vmatpush1.msra.mxu0 0.0
    %402 = vmatprep.subr.mxu0 0.0
    %403 = vmatpush1.msra.mxu0 0.0
    %404 = vmatprep.subr.mxu0 0.0
    %405 = vmatpush1.msra.mxu0 0.0
    %406 = vmatprep.subr.mxu0 0.0
    %407 = vmatpush1.msra.mxu0 0.0
    %408 = vmatprep.subr.mxu0 0.0
    %409 = vmatpush1.msra.mxu0 0.0
    %410 = vmatprep.subr.mxu0 0.0
    %411 = vmatpush1.msra.mxu0 0.0
    %412 = vmatprep.subr.mxu0 0.0
    %413 = vmatpush1.msra.mxu0 0.0
    %414 = vmatprep.mubr.f32.mxu0 0.0
    %v415 = vand.u32 %v45, 4294901760
    %416 = vmatmul.mubr.f32.gmra.mrb[0].mxu0 %v415
    %v417 = vpop.f32.mrb[0].mxu0
    %v418 = vadd.f32 %v344, %v417
    %v419 = vpop.f32.mrb[0].mxu0
    %420 = vdwg.mxu0
    %421 = vmatprep.subr.mxu0 0.0
    %v422 = vand.u32 %v37, 4294901760
    %423 = vmatpush1.msra.mxu0 %v422
    %424 = vmatprep.subr.mxu0 0.0
    %425 = vmatpush1.msra.mxu0 0.0
    %426 = vmatprep.subr.mxu0 0.0
    %427 = vmatpush1.msra.mxu0 0.0
    %428 = vmatprep.subr.mxu0 0.0
    %429 = vmatpush1.msra.mxu0 0.0
    %430 = vmatprep.subr.mxu0 0.0
    %431 = vmatpush1.msra.mxu0 0.0
    %432 = vmatprep.subr.mxu0 0.0
    %433 = vmatpush1.msra.mxu0 0.0
    %434 = vmatprep.subr.mxu0 0.0
    %435 = vmatpush1.msra.mxu0 0.0
    %436 = vmatprep.subr.mxu0 0.0
    %437 = vmatpush1.msra.mxu0 0.0
    %438 = vmatprep.subr.mxu0 0.0
    %439 = vmatpush1.msra.mxu0 0.0
    %440 = vmatprep.subr.mxu0 0.0
    %441 = vmatpush1.msra.mxu0 0.0
    %442 = vmatprep.subr.mxu0 0.0
    %443 = vmatpush1.msra.mxu0 0.0
    %444 = vmatprep.subr.mxu0 0.0
    %445 = vmatpush1.msra.mxu0 0.0
    %446 = vmatprep.subr.mxu0 0.0
    %447 = vmatpush1.msra.mxu0 0.0
    %448 = vmatprep.subr.mxu0 0.0
    %449 = vmatpush1.msra.mxu0 0.0
    %450 = vmatprep.subr.mxu0 0.0
    %451 = vmatpush1.msra.mxu0 0.0
    %452 = vmatprep.subr.mxu0 0.0
    %453 = vmatpush1.msra.mxu0 0.0
    %454 = vmatprep.subr.mxu0 0.0
    %455 = vmatpush1.msra.mxu0 0.0
    %456 = vmatprep.subr.mxu0 0.0
    %457 = vmatpush1.msra.mxu0 0.0
    %458 = vmatprep.subr.mxu0 0.0
    %459 = vmatpush1.msra.mxu0 0.0
    %460 = vmatprep.subr.mxu0 0.0
    %461 = vmatpush1.msra.mxu0 0.0
    %462 = vmatprep.subr.mxu0 0.0
    %463 = vmatpush1.msra.mxu0 0.0
    %464 = vmatprep.subr.mxu0 0.0
    %465 = vmatpush1.msra.mxu0 0.0
    %466 = vmatprep.subr.mxu0 0.0
    %467 = vmatpush1.msra.mxu0 0.0
    %468 = vmatprep.subr.mxu0 0.0
    %469 = vmatpush1.msra.mxu0 0.0
    %470 = vmatprep.subr.mxu0 0.0
    %471 = vmatpush1.msra.mxu0 0.0
    %472 = vmatprep.subr.mxu0 0.0
    %473 = vmatpush1.msra.mxu0 0.0
    %474 = vmatprep.subr.mxu0 0.0
    %475 = vmatpush1.msra.mxu0 0.0
    %476 = vmatprep.subr.mxu0 0.0
    %477 = vmatpush1.msra.mxu0 0.0
    %478 = vmatprep.subr.mxu0 0.0
    %479 = vmatpush1.msra.mxu0 0.0
    %480 = vmatprep.subr.mxu0 0.0
    %481 = vmatpush1.msra.mxu0 0.0
    %482 = vmatprep.subr.mxu0 0.0
    %483 = vmatpush1.msra.mxu0 0.0
    %484 = vmatprep.subr.mxu0 0.0
    %485 = vmatpush1.msra.mxu0 0.0
    %486 = vmatprep.mubr.f32.mxu0 0.0
    %v487 = vand.u32 %v45, 4294901760
    %488 = vmatmul.mubr.f32.gmra.mrb[0].mxu0 %v487
    %v489 = vpop.f32.mrb[0].mxu0
    %v490 = vadd.f32 %v418, %v489
    %v491 = vpop.f32.mrb[0].mxu0
    %492 = vdwg.mxu0
    %v494 = vsel %vm43, %v40, 0
    %496 = vmatprep.subr.mxu0 0.0
    %v497 = vand.u32 %v38, 4294901760
    %498 = vmatpush1.msra.mxu0 %v497
    %499 = vmatprep.subr.mxu0 0.0
    %500 = vmatpush1.msra.mxu0 0.0
    %501 = vmatprep.subr.mxu0 0.0
    %502 = vmatpush1.msra.mxu0 0.0
    %503 = vmatprep.subr.mxu0 0.0
    %504 = vmatpush1.msra.mxu0 0.0
    %505 = vmatprep.subr.mxu0 0.0
    %506 = vmatpush1.msra.mxu0 0.0
    %507 = vmatprep.subr.mxu0 0.0
    %508 = vmatpush1.msra.mxu0 0.0
    %509 = vmatprep.subr.mxu0 0.0
    %510 = vmatpush1.msra.mxu0 0.0
    %511 = vmatprep.subr.mxu0 0.0
    %512 = vmatpush1.msra.mxu0 0.0
    %513 = vmatprep.subr.mxu0 0.0
    %514 = vmatpush1.msra.mxu0 0.0
    %515 = vmatprep.subr.mxu0 0.0
    %516 = vmatpush1.msra.mxu0 0.0
    %517 = vmatprep.subr.mxu0 0.0
    %518 = vmatpush1.msra.mxu0 0.0
    %519 = vmatprep.subr.mxu0 0.0
    %520 = vmatpush1.msra.mxu0 0.0
    %521 = vmatprep.subr.mxu0 0.0
    %522 = vmatpush1.msra.mxu0 0.0
    %523 = vmatprep.subr.mxu0 0.0
    %524 = vmatpush1.msra.mxu0 0.0
    %525 = vmatprep.subr.mxu0 0.0
    %526 = vmatpush1.msra.mxu0 0.0
    %527 = vmatprep.subr.mxu0 0.0
    %528 = vmatpush1.msra.mxu0 0.0
    %529 = vmatprep.subr.mxu0 0.0
    %530 = vmatpush1.msra.mxu0 0.0
    %531 = vmatprep.subr.mxu0 0.0
    %532 = vmatpush1.msra.mxu0 0.0
    %533 = vmatprep.subr.mxu0 0.0
    %534 = vmatpush1.msra.mxu0 0.0
    %535 = vmatprep.subr.mxu0 0.0
    %536 = vmatpush1.msra.mxu0 0.0
    %537 = vmatprep.subr.mxu0 0.0
    %538 = vmatpush1.msra.mxu0 0.0
    %539 = vmatprep.subr.mxu0 0.0
    %540 = vmatpush1.msra.mxu0 0.0
    %541 = vmatprep.subr.mxu0 0.0
    %542 = vmatpush1.msra.mxu0 0.0
    %543 = vmatprep.subr.mxu0 0.0
    %544 = vmatpush1.msra.mxu0 0.0
    %545 = vmatprep.subr.mxu0 0.0
    %546 = vmatpush1.msra.mxu0 0.0
    %547 = vmatprep.subr.mxu0 0.0
    %548 = vmatpush1.msra.mxu0 0.0
    %549 = vmatprep.subr.mxu0 0.0
    %550 = vmatpush1.msra.mxu0 0.0
    %551 = vmatprep.subr.mxu0 0.0
    %552 = vmatpush1.msra.mxu0 0.0
    %553 = vmatprep.subr.mxu0 0.0
    %554 = vmatpush1.msra.mxu0 0.0
    %555 = vmatprep.subr.mxu0 0.0
    %556 = vmatpush1.msra.mxu0 0.0
    %557 = vmatprep.subr.mxu0 0.0
    %558 = vmatpush1.msra.mxu0 0.0
    %559 = vmatprep.subr.mxu0 0.0
    %560 = vmatpush1.msra.mxu0 0.0
    %561 = vmatprep.mubr.f32.mxu0 0.0
    %v562 = vand.u32 %v494, 4294901760
    %v563 = vsub.f32 %v494, %v562
    %v564 = vand.u32 %v563, 4294901760
    %v565 = vsub.f32 %v563, %v564
    %v566 = vand.u32 %v565, 4294901760
    %567 = vmatmul.mubr.f32.gmra.mrb[0].mxu0 %v566
    %v568 = vpop.f32.mrb[0].mxu0
    %v569 = vadd.f32 0.0, %v568
    %v570 = vpop.f32.mrb[0].mxu0
    %571 = vdwg.mxu0
    %572 = vmatprep.subr.mxu0 0.0
    %v573 = vand.u32 %v38, 4294901760
    %v574 = vsub.f32 %v38, %v573
    %v575 = vand.u32 %v574, 4294901760
    %v576 = vsub.f32 %v574, %v575
    %v577 = vand.u32 %v576, 4294901760
    %578 = vmatpush1.msra.mxu0 %v577
    %579 = vmatprep.subr.mxu0 0.0
    %580 = vmatpush1.msra.mxu0 0.0
    %581 = vmatprep.subr.mxu0 0.0
    %582 = vmatpush1.msra.mxu0 0.0
    %583 = vmatprep.subr.mxu0 0.0
    %584 = vmatpush1.msra.mxu0 0.0
    %585 = vmatprep.subr.mxu0 0.0
    %586 = vmatpush1.msra.mxu0 0.0
    %587 = vmatprep.subr.mxu0 0.0
    %588 = vmatpush1.msra.mxu0 0.0
    %589 = vmatprep.subr.mxu0 0.0
    %590 = vmatpush1.msra.mxu0 0.0
    %591 = vmatprep.subr.mxu0 0.0
    %592 = vmatpush1.msra.mxu0 0.0
    %593 = vmatprep.subr.mxu0 0.0
    %594 = vmatpush1.msra.mxu0 0.0
    %595 = vmatprep.subr.mxu0 0.0
    %596 = vmatpush1.msra.mxu0 0.0
    %597 = vmatprep.subr.mxu0 0.0
    %598 = vmatpush1.msra.mxu0 0.0
    %599 = vmatprep.subr.mxu0 0.0
    %600 = vmatpush1.msra.mxu0 0.0
    %601 = vmatprep.subr.mxu0 0.0
    %602 = vmatpush1.msra.mxu0 0.0
    %603 = vmatprep.subr.mxu0 0.0
    %604 = vmatpush1.msra.mxu0 0.0
    %605 = vmatprep.subr.mxu0 0.0
    %606 = vmatpush1.msra.mxu0 0.0
    %607 = vmatprep.subr.mxu0 0.0
    %608 = vmatpush1.msra.mxu0 0.0
    %609 = vmatprep.subr.mxu0 0.0
    %610 = vmatpush1.msra.mxu0 0.0
    %611 = vmatprep.subr.mxu0 0.0
    %612 = vmatpush1.msra.mxu0 0.0
    %613 = vmatprep.subr.mxu0 0.0
    %614 = vmatpush1.msra.mxu0 0.0
    %615 = vmatprep.subr.mxu0 0.0
    %616 = vmatpush1.msra.mxu0 0.0
    %617 = vmatprep.subr.mxu0 0.0
    %618 = vmatpush1.msra.mxu0 0.0
    %619 = vmatprep.subr.mxu0 0.0
    %620 = vmatpush1.msra.mxu0 0.0
    %621 = vmatprep.subr.mxu0 0.0
    %622 = vmatpush1.msra.mxu0 0.0
    %623 = vmatprep.subr.mxu0 0.0
    %624 = vmatpush1.msra.mxu0 0.0
    %625 = vmatprep.subr.mxu0 0.0
    %626 = vmatpush1.msra.mxu0 0.0
    %627 = vmatprep.subr.mxu0 0.0
    %628 = vmatpush1.msra.mxu0 0.0
    %629 = vmatprep.subr.mxu0 0.0
    %630 = vmatpush1.msra.mxu0 0.0
    %631 = vmatprep.subr.mxu0 0.0
    %632 = vmatpush1.msra.mxu0 0.0
    %633 = vmatprep.subr.mxu0 0.0
    %634 = vmatpush1.msra.mxu0 0.0
    %635 = vmatprep.subr.mxu0 0.0
    %636 = vmatpush1.msra.mxu0 0.0
    %637 = vmatprep.subr.mxu0 0.0
    %638 = vmatpush1.msra.mxu0 0.0
    %639 = vmatprep.subr.mxu0 0.0
    %640 = vmatpush1.msra.mxu0 0.0
    %641 = vmatprep.mubr.f32.mxu0 0.0
    %v642 = vand.u32 %v494, 4294901760
    %643 = vmatmul.mubr.f32.gmra.mrb[0].mxu0 %v642
    %v644 = vpop.f32.mrb[0].mxu0
    %v645 = vadd.f32 %v569, %v644
    %v646 = vpop.f32.mrb[0].mxu0
    %647 = vdwg.mxu0
    %648 = vmatprep.subr.mxu0 0.0
    %v649 = vand.u32 %v38, 4294901760
    %v650 = vsub.f32 %v38, %v649
    %651 = vmatpush1.msra.mxu0 %v650
    %652 = vmatprep.subr.mxu0 0.0
    %653 = vmatpush1.msra.mxu0 0.0
    %654 = vmatprep.subr.mxu0 0.0
    %655 = vmatpush1.msra.mxu0 0.0
    %656 = vmatprep.subr.mxu0 0.0
    %657 = vmatpush1.msra.mxu0 0.0
    %658 = vmatprep.subr.mxu0 0.0
    %659 = vmatpush1.msra.mxu0 0.0
    %660 = vmatprep.subr.mxu0 0.0
    %661 = vmatpush1.msra.mxu0 0.0
    %662 = vmatprep.subr.mxu0 0.0
    %663 = vmatpush1.msra.mxu0 0.0
    %664 = vmatprep.subr.mxu0 0.0
    %665 = vmatpush1.msra.mxu0 0.0
    %666 = vmatprep.subr.mxu0 0.0
    %667 = vmatpush1.msra.mxu0 0.0
    %668 = vmatprep.subr.mxu0 0.0
    %669 = vmatpush1.msra.mxu0 0.0
    %670 = vmatprep.subr.mxu0 0.0
    %671 = vmatpush1.msra.mxu0 0.0
    %672 = vmatprep.subr.mxu0 0.0
    %673 = vmatpush1.msra.mxu0 0.0
    %674 = vmatprep.subr.mxu0 0.0
    %675 = vmatpush1.msra.mxu0 0.0
    %676 = vmatprep.subr.mxu0 0.0
    %677 = vmatpush1.msra.mxu0 0.0
    %678 = vmatprep.subr.mxu0 0.0
    %679 = vmatpush1.msra.mxu0 0.0
    %680 = vmatprep.subr.mxu0 0.0
    %681 = vmatpush1.msra.mxu0 0.0
    %682 = vmatprep.subr.mxu0 0.0
    %683 = vmatpush1.msra.mxu0 0.0
    %684 = vmatprep.subr.mxu0 0.0
    %685 = vmatpush1.msra.mxu0 0.0
    %686 = vmatprep.subr.mxu0 0.0
    %687 = vmatpush1.msra.mxu0 0.0
    %688 = vmatprep.subr.mxu0 0.0
    %689 = vmatpush1.msra.mxu0 0.0
    %690 = vmatprep.subr.mxu0 0.0
    %691 = vmatpush1.msra.mxu0 0.0
    %692 = vmatprep.subr.mxu0 0.0
    %693 = vmatpush1.msra.mxu0 0.0
    %694 = vmatprep.subr.mxu0 0.0
    %695 = vmatpush1.msra.mxu0 0.0
    %696 = vmatprep.subr.mxu0 0.0
    %697 = vmatpush1.msra.mxu0 0.0
    %698 = vmatprep.subr.mxu0 0.0
    %699 = vmatpush1.msra.mxu0 0.0
    %700 = vmatprep.subr.mxu0 0.0
    %701 = vmatpush1.msra.mxu0 0.0
    %702 = vmatprep.subr.mxu0 0.0
    %703 = vmatpush1.msra.mxu0 0.0
    %704 = vmatprep.subr.mxu0 0.0
    %705 = vmatpush1.msra.mxu0 0.0
    %706 = vmatprep.subr.mxu0 0.0
    %707 = vmatpush1.msra.mxu0 0.0
    %708 = vmatprep.subr.mxu0 0.0
    %709 = vmatpush1.msra.mxu0 0.0
    %710 = vmatprep.subr.mxu0 0.0
    %711 = vmatpush1.msra.mxu0 0.0
    %712 = vmatprep.subr.mxu0 0.0
    %713 = vmatpush1.msra.mxu0 0.0
    %714 = vmatprep.mubr.f32.mxu0 0.0
    %v715 = vand.u32 %v494, 4294901760
    %v716 = vsub.f32 %v494, %v715
    %717 = vmatmul.mubr.f32.gmra.mrb[0].mxu0 %v716
    %v718 = vpop.f32.mrb[0].mxu0
    %v719 = vadd.f32 %v645, %v718
    %v720 = vpop.f32.mrb[0].mxu0
    %721 = vdwg.mxu0
    %722 = vmatprep.subr.mxu0 0.0
    %v723 = vand.u32 %v38, 4294901760
    %724 = vmatpush1.msra.mxu0 %v723
    %725 = vmatprep.subr.mxu0 0.0
    %726 = vmatpush1.msra.mxu0 0.0
    %727 = vmatprep.subr.mxu0 0.0
    %728 = vmatpush1.msra.mxu0 0.0
    %729 = vmatprep.subr.mxu0 0.0
    %730 = vmatpush1.msra.mxu0 0.0
    %731 = vmatprep.subr.mxu0 0.0
    %732 = vmatpush1.msra.mxu0 0.0
    %733 = vmatprep.subr.mxu0 0.0
    %734 = vmatpush1.msra.mxu0 0.0
    %735 = vmatprep.subr.mxu0 0.0
    %736 = vmatpush1.msra.mxu0 0.0
    %737 = vmatprep.subr.mxu0 0.0
    %738 = vmatpush1.msra.mxu0 0.0
    %739 = vmatprep.subr.mxu0 0.0
    %740 = vmatpush1.msra.mxu0 0.0
    %741 = vmatprep.subr.mxu0 0.0
    %742 = vmatpush1.msra.mxu0 0.0
    %743 = vmatprep.subr.mxu0 0.0
    %744 = vmatpush1.msra.mxu0 0.0
    %745 = vmatprep.subr.mxu0 0.0
    %746 = vmatpush1.msra.mxu0 0.0
    %747 = vmatprep.subr.mxu0 0.0
    %748 = vmatpush1.msra.mxu0 0.0
    %749 = vmatprep.subr.mxu0 0.0
    %750 = vmatpush1.msra.mxu0 0.0
    %751 = vmatprep.subr.mxu0 0.0
    %752 = vmatpush1.msra.mxu0 0.0
    %753 = vmatprep.subr.mxu0 0.0
    %754 = vmatpush1.msra.mxu0 0.0
    %755 = vmatprep.subr.mxu0 0.0
    %756 = vmatpush1.msra.mxu0 0.0
    %757 = vmatprep.subr.mxu0 0.0
    %758 = vmatpush1.msra.mxu0 0.0
    %759 = vmatprep.subr.mxu0 0.0
    %760 = vmatpush1.msra.mxu0 0.0
    %761 = vmatprep.subr.mxu0 0.0
    %762 = vmatpush1.msra.mxu0 0.0
    %763 = vmatprep.subr.mxu0 0.0
    %764 = vmatpush1.msra.mxu0 0.0
    %765 = vmatprep.subr.mxu0 0.0
    %766 = vmatpush1.msra.mxu0 0.0
    %767 = vmatprep.subr.mxu0 0.0
    %768 = vmatpush1.msra.mxu0 0.0
    %769 = vmatprep.subr.mxu0 0.0
    %770 = vmatpush1.msra.mxu0 0.0
    %771 = vmatprep.subr.mxu0 0.0
    %772 = vmatpush1.msra.mxu0 0.0
    %773 = vmatprep.subr.mxu0 0.0
    %774 = vmatpush1.msra.mxu0 0.0
    %775 = vmatprep.subr.mxu0 0.0
    %776 = vmatpush1.msra.mxu0 0.0
    %777 = vmatprep.subr.mxu0 0.0
    %778 = vmatpush1.msra.mxu0 0.0
    %779 = vmatprep.subr.mxu0 0.0
    %780 = vmatpush1.msra.mxu0 0.0
    %781 = vmatprep.subr.mxu0 0.0
    %782 = vmatpush1.msra.mxu0 0.0
    %783 = vmatprep.subr.mxu0 0.0
    %784 = vmatpush1.msra.mxu0 0.0
    %785 = vmatprep.subr.mxu0 0.0
    %786 = vmatpush1.msra.mxu0 0.0
    %787 = vmatprep.mubr.f32.mxu0 0.0
    %v788 = vand.u32 %v494, 4294901760
    %v789 = vsub.f32 %v494, %v788
    %v790 = vand.u32 %v789, 4294901760
    %791 = vmatmul.mubr.f32.gmra.mrb[0].mxu0 %v790
    %v792 = vpop.f32.mrb[0].mxu0
    %v793 = vadd.f32 %v719, %v792
    %v794 = vpop.f32.mrb[0].mxu0
    %795 = vdwg.mxu0
    %796 = vmatprep.subr.mxu0 0.0
    %v797 = vand.u32 %v38, 4294901760
    %v798 = vsub.f32 %v38, %v797
    %v799 = vand.u32 %v798, 4294901760
    %800 = vmatpush1.msra.mxu0 %v799
    %801 = vmatprep.subr.mxu0 0.0
    %802 = vmatpush1.msra.mxu0 0.0
    %803 = vmatprep.subr.mxu0 0.0
    %804 = vmatpush1.msra.mxu0 0.0
    %805 = vmatprep.subr.mxu0 0.0
    %806 = vmatpush1.msra.mxu0 0.0
    %807 = vmatprep.subr.mxu0 0.0
    %808 = vmatpush1.msra.mxu0 0.0
    %809 = vmatprep.subr.mxu0 0.0
    %810 = vmatpush1.msra.mxu0 0.0
    %811 = vmatprep.subr.mxu0 0.0
    %812 = vmatpush1.msra.mxu0 0.0
    %813 = vmatprep.subr.mxu0 0.0
    %814 = vmatpush1.msra.mxu0 0.0
    %815 = vmatprep.subr.mxu0 0.0
    %816 = vmatpush1.msra.mxu0 0.0
    %817 = vmatprep.subr.mxu0 0.0
    %818 = vmatpush1.msra.mxu0 0.0
    %819 = vmatprep.subr.mxu0 0.0
    %820 = vmatpush1.msra.mxu0 0.0
    %821 = vmatprep.subr.mxu0 0.0
    %822 = vmatpush1.msra.mxu0 0.0
    %823 = vmatprep.subr.mxu0 0.0
    %824 = vmatpush1.msra.mxu0 0.0
    %825 = vmatprep.subr.mxu0 0.0
    %826 = vmatpush1.msra.mxu0 0.0
    %827 = vmatprep.subr.mxu0 0.0
    %828 = vmatpush1.msra.mxu0 0.0
    %829 = vmatprep.subr.mxu0 0.0
    %830 = vmatpush1.msra.mxu0 0.0
    %831 = vmatprep.subr.mxu0 0.0
    %832 = vmatpush1.msra.mxu0 0.0
    %833 = vmatprep.subr.mxu0 0.0
    %834 = vmatpush1.msra.mxu0 0.0
    %835 = vmatprep.subr.mxu0 0.0
    %836 = vmatpush1.msra.mxu0 0.0
    %837 = vmatprep.subr.mxu0 0.0
    %838 = vmatpush1.msra.mxu0 0.0
    %839 = vmatprep.subr.mxu0 0.0
    %840 = vmatpush1.msra.mxu0 0.0
    %841 = vmatprep.subr.mxu0 0.0
    %842 = vmatpush1.msra.mxu0 0.0
    %843 = vmatprep.subr.mxu0 0.0
    %844 = vmatpush1.msra.mxu0 0.0
    %845 = vmatprep.subr.mxu0 0.0
    %846 = vmatpush1.msra.mxu0 0.0
    %847 = vmatprep.subr.mxu0 0.0
    %848 = vmatpush1.msra.mxu0 0.0
    %849 = vmatprep.subr.mxu0 0.0
    %850 = vmatpush1.msra.mxu0 0.0
    %851 = vmatprep.subr.mxu0 0.0
    %852 = vmatpush1.msra.mxu0 0.0
    %853 = vmatprep.subr.mxu0 0.0
    %854 = vmatpush1.msra.mxu0 0.0
    %855 = vmatprep.subr.mxu0 0.0
    %856 = vmatpush1.msra.mxu0 0.0
    %857 = vmatprep.subr.mxu0 0.0
    %858 = vmatpush1.msra.mxu0 0.0
    %859 = vmatprep.subr.mxu0 0.0
    %860 = vmatpush1.msra.mxu0 0.0
    %861 = vmatprep.subr.mxu0 0.0
    %862 = vmatpush1.msra.mxu0 0.0
    %863 = vmatprep.mubr.f32.mxu0 0.0
    %v864 = vand.u32 %v494, 4294901760
    %865 = vmatmul.mubr.f32.gmra.mrb[0].mxu0 %v864
    %v866 = vpop.f32.mrb[0].mxu0
    %v867 = vadd.f32 %v793, %v866
    %v868 = vpop.f32.mrb[0].mxu0
    %869 = vdwg.mxu0
    %870 = vmatprep.subr.mxu0 0.0
    %v871 = vand.u32 %v38, 4294901760
    %872 = vmatpush1.msra.mxu0 %v871
    %873 = vmatprep.subr.mxu0 0.0
    %874 = vmatpush1.msra.mxu0 0.0
    %875 = vmatprep.subr.mxu0 0.0
    %876 = vmatpush1.msra.mxu0 0.0
    %877 = vmatprep.subr.mxu0 0.0
    %878 = vmatpush1.msra.mxu0 0.0
    %879 = vmatprep.subr.mxu0 0.0
    %880 = vmatpush1.msra.mxu0 0.0
    %881 = vmatprep.subr.mxu0 0.0
    %882 = vmatpush1.msra.mxu0 0.0
    %883 = vmatprep.subr.mxu0 0.0
    %884 = vmatpush1.msra.mxu0 0.0
    %885 = vmatprep.subr.mxu0 0.0
    %886 = vmatpush1.msra.mxu0 0.0
    %887 = vmatprep.subr.mxu0 0.0
    %888 = vmatpush1.msra.mxu0 0.0
    %889 = vmatprep.subr.mxu0 0.0
    %890 = vmatpush1.msra.mxu0 0.0
    %891 = vmatprep.subr.mxu0 0.0
    %892 = vmatpush1.msra.mxu0 0.0
    %893 = vmatprep.subr.mxu0 0.0
    %894 = vmatpush1.msra.mxu0 0.0
    %895 = vmatprep.subr.mxu0 0.0
    %896 = vmatpush1.msra.mxu0 0.0
    %897 = vmatprep.subr.mxu0 0.0
    %898 = vmatpush1.msra.mxu0 0.0
    %899 = vmatprep.subr.mxu0 0.0
    %900 = vmatpush1.msra.mxu0 0.0
    %901 = vmatprep.subr.mxu0 0.0
    %902 = vmatpush1.msra.mxu0 0.0
    %903 = vmatprep.subr.mxu0 0.0
    %904 = vmatpush1.msra.mxu0 0.0
    %905 = vmatprep.subr.mxu0 0.0
    %906 = vmatpush1.msra.mxu0 0.0
    %907 = vmatprep.subr.mxu0 0.0
    %908 = vmatpush1.msra.mxu0 0.0
    %909 = vmatprep.subr.mxu0 0.0
    %910 = vmatpush1.msra.mxu0 0.0
    %911 = vmatprep.subr.mxu0 0.0
    %912 = vmatpush1.msra.mxu0 0.0
    %913 = vmatprep.subr.mxu0 0.0
    %914 = vmatpush1.msra.mxu0 0.0
    %915 = vmatprep.subr.mxu0 0.0
    %916 = vmatpush1.msra.mxu0 0.0
    %917 = vmatprep.subr.mxu0 0.0
    %918 = vmatpush1.msra.mxu0 0.0
    %919 = vmatprep.subr.mxu0 0.0
    %920 = vmatpush1.msra.mxu0 0.0
    %921 = vmatprep.subr.mxu0 0.0
    %922 = vmatpush1.msra.mxu0 0.0
    %923 = vmatprep.subr.mxu0 0.0
    %924 = vmatpush1.msra.mxu0 0.0
    %925 = vmatprep.subr.mxu0 0.0
    %926 = vmatpush1.msra.mxu0 0.0
    %927 = vmatprep.subr.mxu0 0.0
    %928 = vmatpush1.msra.mxu0 0.0
    %929 = vmatprep.subr.mxu0 0.0
    %930 = vmatpush1.msra.mxu0 0.0
    %931 = vmatprep.subr.mxu0 0.0
    %932 = vmatpush1.msra.mxu0 0.0
    %933 = vmatprep.subr.mxu0 0.0
    %934 = vmatpush1.msra.mxu0 0.0
    %935 = vmatprep.mubr.f32.mxu0 0.0
    %v936 = vand.u32 %v494, 4294901760
    %937 = vmatmul.mubr.f32.gmra.mrb[0].mxu0 %v936
    %v938 = vpop.f32.mrb[0].mxu0
    %v939 = vadd.f32 %v867, %v938
    %v940 = vpop.f32.mrb[0].mxu0
    %941 = vdwg.mxu0
    %v942 = vadd.f32 %v41, %v490
    %v943 = vadd.f32 %v42, %v939
    %vm944 = vcmask 253952
    %945 = vst.msk [vmem:[#allocation6] sm:$0x1] %vm944, %v942
    %946 = vst.msk [vmem:[#allocation6 + $0x1] sm:$0x1] %vm944, %v943
    // Predicated region
    $region22: #{tpu_custom_call.1} parent=1 // pred_check
      %p947 = pneg %p30
    $region23: #{tpu_custom_call.1} parent=1 // pred_check_branch
      %949 = sbr.rel (%p947) target = $region25
    $region24: #{tpu_custom_call.1} parent=1 // pred_region
      %s950 = sld [smem:[#allocation2]]
      %v951 = vstv %s950
      %v952 = vrcp.pop %v951
      %s953 = vtos %v952
      %v954 = vld [vmem:[#allocation6] sm:$0x1]
      %v955 = vld [vmem:[#allocation6 + $0x1] sm:$0x1]
      %v956 = vstv %s953
      %v957 = vmul.f32 %v954, %v956
      %v958 = vmul.f32 %v955, %v956
      %959 = vst.msk [vmem:[#allocation6] sm:$0x1] %vm944, %v957
      %960 = vst.msk [vmem:[#allocation6 + $0x1] sm:$0x1] %vm944, %v958
    $region25: #{tpu_custom_call.1} parent=1 // pred_fallthru
      _
    // Predicated region
    $region26: #{tpu_custom_call.1} parent=1 // pred_check
      _
    $region27: #{tpu_custom_call.1} parent=1 // pred_check_branch
      %962 = sbr.rel (0) target = $region29
    $region28: #{tpu_custom_call.1} parent=1 // pred_region
      %s964 = ssub.s32 32, 32
      %965 = vsyncadd [#allocation5], %s964
      %s966 = sshll.u32 [#allocation6], 4
      %s967 = int_to_ptr.vmem [resolvable:$true] %s966
      %972 = dma.vmem_to_hbm [thread:$0]  %s967, 32, %s3, [#allocation5], 16, 16, 1
    $region29: #{tpu_custom_call.1} parent=1 // pred_fallthru
      _
    // Predicated region
    $region30: #{tpu_custom_call.1} parent=1 // pred_check
      _
    $region31: #{tpu_custom_call.1} parent=1 // pred_check_branch
      %974 = sbr.rel (0) target = $region33
    $region32: #{tpu_custom_call.1} parent=1 // pred_region
      %975 = dma.done [#allocation5], 32
    $region33: #{tpu_custom_call.1} parent=1 // pred_fallthru
      _
    %976 = vsyncpa [#allocation4], 1
    %977 = vsyncpa [#allocation5], 1

</llo_original>
